<compile_context>
chip_gen: v5e
topology: v5e:2x2
jax: 0.10.0
libtpu: 0.0.40
codegen_flags: <defaults>
</compile_context>

<pallas_src>
import functools
import math

import jax
import jax.numpy as jnp
from jax import lax
from jax.experimental import pallas as pl
from jax.experimental.pallas import tpu as pltpu

LANE = 128
SUBLANE = 8
TILE_B_MAX = 1024                      # rows per grid step (128-aligned for big batches)
NEG_MASK = jnp.float32(-1e30)          # baked into padded class lanes of b4


def _round_up(x, m):
    return (x + m - 1) // m * m


def mlp_stu_kernel(x_ref,
                   w1_ref, b1_ref,
                   w2_ref, b2_ref,
                   w3_ref, b3_ref,
                   w4_ref, b4_ref,
                   *out_refs,
                   want_logits, want_preds):
    """Fused 4-layer MLP (+ optional masked argmax) for one (tile_b, d_in) batch tile."""
    x = x_ref[...]                                            # bf16 (tile_b, d_in), real width

    h = jnp.dot(x, w1_ref[...], preferred_element_type=jnp.float32) + b1_ref[...]
    h = jnp.maximum(h, 0.0).astype(jnp.bfloat16)              # relu(drop1(fc1(x))), dropout = id

    h = jnp.dot(h, w2_ref[...], preferred_element_type=jnp.float32) + b2_ref[...]
    h = jnp.maximum(h, 0.0).astype(jnp.bfloat16)              # relu(drop2(fc2(.)))

    h = jnp.dot(h, w3_ref[...], preferred_element_type=jnp.float32) + b3_ref[...]
    h = jnp.maximum(h, 0.0).astype(jnp.bfloat16)              # relu(drop3(fc3(.)))

    logits = jnp.dot(h, w4_ref[...], preferred_element_type=jnp.float32) + b4_ref[...]
    # Padded class lanes carry bias == NEG_MASK (dot contributes exactly 0 there),
    # so they never win the argmax and get sliced off outside: no extra select here.

    idx = 0
    if want_logits:
        out_refs[idx][...] = logits.astype(out_refs[idx].dtype)
        idx += 1
    if want_preds:
        # Fused argmax epilogue; first-max tie-breaking matches torch.argmax.
        col = lax.broadcasted_iota(jnp.int32, logits.shape, 1)
        row_max = jnp.max(logits, axis=1, keepdims=True)
        first_idx = jnp.min(jnp.where(logits == row_max, col, logits.shape[1]),
                            axis=1, keepdims=True)
        out_refs[idx][...] = first_idx.astype(jnp.int32)


def prepare_params(params):
    """One-time prep: transpose weights to (in, out), pad out-dims (and hidden in-dims)
    to 128 lanes, cast weights to bf16, keep biases f32, bake the class mask into b4.

    params: PyTorch-convention dict with W{i}: (out, in), b{i}: (out,).
    """
    prepped = {}
    for li in (1, 2, 3, 4):
        w = params[f"W{li}"]
        b = params[f"b{li}"]
        d_out, d_in = w.shape
        # Layer 1 keeps its real input width (x is NOT lane-padded); hidden
        # activations are 128-wide, so layers 2-4 zero-pad their input dims.
        in_pad = d_in if li == 1 else _round_up(d_in, LANE)
        out_pad = _round_up(d_out, LANE)
        w_t = jnp.pad(w.T.astype(jnp.float32),
                      ((0, in_pad - d_in), (0, out_pad - d_out))).astype(jnp.bfloat16)
        b_p = jnp.pad(b.astype(jnp.float32), (0, out_pad - d_out))
        if li == 4:
            # Padded class lanes get a huge negative bias -> masked out of argmax.
            b_p = jnp.where(jnp.arange(out_pad) < d_out, b_p, NEG_MASK)
        prepped[f"W{li}"] = w_t
        prepped[f"b{li}"] = b_p.reshape(1, out_pad)
    return prepped


@functools.partial(jax.jit,
                   static_argnames=("num_classes", "want_logits", "want_preds"))
def mlp_stu_apply(x, prepped, *, num_classes, want_logits=True, want_preds=True):
    """Runs the fused kernel. Returns (logits[:, :num_classes] or None, preds or None)."""
    assert want_logits or want_preds
    batch, in_features = x.shape
    c_pad = prepped["W4"].shape[1]

    # Batch tile: large enough to amortize per-step grid overhead; when there is
    # enough work, force >=2 grid steps so v7x's two TensorCores both get a
    # share ("parallel" axis).  v5e/v6e have one TC; the extra step is noise.
    if batch >= 2 * LANE:
        tile_b = min(TILE_B_MAX, _round_up(pl.cdiv(batch, 2), LANE))
    else:
        tile_b = min(TILE_B_MAX, _round_up(max(batch, 1), SUBLANE))
    batch_pad = _round_up(max(batch, 1), tile_b)
    grid = (batch_pad // tile_b,)

    # Only the batch dim is padded; the feature dim stays at its real width
    # (block last dim == full array extent is allowed by the (8,128) rule).
    x_bf16 = x.astype(jnp.bfloat16)
    if batch_pad != batch:
        x_bf16 = jnp.pad(x_bf16, ((0, batch_pad - batch), (0, 0)))

    in_specs = [pl.BlockSpec((tile_b, in_features), lambda i: (i, 0))]
    args = [x_bf16]
    for li in (1, 2, 3, 4):
        w = prepped[f"W{li}"]
        b = prepped[f"b{li}"]
        # Constant block index -> weights/biases stay VMEM-resident across steps.
        in_specs.append(pl.BlockSpec(w.shape, lambda i: (0, 0)))
        in_specs.append(pl.BlockSpec(b.shape, lambda i: (0, 0)))
        args.append(w)
        args.append(b)

    out_specs = []
    out_shape = []
    if want_logits:
        out_specs.append(pl.BlockSpec((tile_b, c_pad), lambda i: (i, 0)))
        out_shape.append(jax.ShapeDtypeStruct((batch_pad, c_pad), jnp.float32))
    if want_preds:
        out_specs.append(pl.BlockSpec((tile_b, 1), lambda i: (i, 0)))
        out_shape.append(jax.ShapeDtypeStruct((batch_pad, 1), jnp.int32))

    outs = pl.pallas_call(
        functools.partial(mlp_stu_kernel,
                          want_logits=want_logits, want_preds=want_preds),
        grid=grid,
        in_specs=in_specs,
        out_specs=tuple(out_specs),
        out_shape=tuple(out_shape),
        compiler_params=pltpu.CompilerParams(
            dimension_semantics=("parallel",)),   # megacore sharding on v7x
    )(*args)

    idx = 0
    logits = preds = None
    if want_logits:
        logits = outs[idx][:batch, :num_classes]
        idx += 1
    if want_preds:
        preds = outs[idx][:batch, 0]
    return logits, preds


def mlp_stu_forward(x, prepped, num_classes):
    """Matches MLP_STU.forward (eval mode). Skips the argmax epilogue."""
    return mlp_stu_apply(x, prepped, num_classes=num_classes,
                         want_logits=True, want_preds=False)[0]


def mlp_stu_prediction(x, prepped, num_classes):
    """Matches MLP_STU.prediction. Prediction-only mode: the 128-lane-padded
    logits writeback (largest HBM stream) is skipped entirely."""
    return mlp_stu_apply(x, prepped, num_classes=num_classes,
                         want_logits=False, want_preds=True)[1]


def init_params(key, input_size, h1, h2, h3, num_classes, teacher_size):
    """Deterministic init mimicking nn.Linear's U(-1/sqrt(fan_in), 1/sqrt(fan_in))."""
    dims = [
        ("W1", (h1, input_size)), ("b1", (h1,)),
        ("W2", (h2, h1)),         ("b2", (h2,)),
        ("W3", (h3, h2)),         ("b3", (h3,)),
        ("W4", (num_classes, h3)), ("b4", (num_classes,)),
        ("Wr", (teacher_size, h3)), ("br", (teacher_size,)),  # self.reg (unused in forward)
    ]
    params = {}
    keys = jax.random.split(key, len(dims))
    for (name, shape), k in zip(dims, keys):
        fan_in = shape[1] if len(shape) == 2 else shape[0]
        bound = 1.0 / math.sqrt(fan_in)
        params[name] = jax.random.uniform(
            k, shape, dtype=jnp.float32, minval=-bound, maxval=bound)
    return params


def reference_forward(x, params):
    """Pure-JAX f32 reference (same math, no Pallas) for a correctness check."""
    h = jnp.maximum(x @ params["W1"].T + params["b1"], 0.0)
    h = jnp.maximum(h @ params["W2"].T + params["b2"], 0.0)
    h = jnp.maximum(h @ params["W3"].T + params["b3"], 0.0)
    return h @ params["W4"].T + params["b4"]


if __name__ == "__main__":
    # Small shapes consistent with the module's forward.
    batch = 8
    input_size, h1, h2, h3 = 32, 64, 48, 32
    num_classes, teacher_size = 10, 16

    root = jax.random.PRNGKey(0)
    k_params, k_x, k_x2 = jax.random.split(root, 3)
    params = init_params(k_params, input_size, h1, h2, h3, num_classes, teacher_size)
    x = jax.random.normal(k_x, (batch, input_size), dtype=jnp.float32)

    # One-time parameter prep (transpose + padding + bf16 cast) — out of the hot path.
    prepped = prepare_params(params)

    # Full path: fused logits + argmax.
    logits, preds = mlp_stu_apply(x, prepped, num_classes=num_classes)
    logits, preds = jax.block_until_ready((logits, preds))

    ref = reference_forward(x, params)
    assert logits.shape == (batch, num_classes)
    # bf16 weights/activations with f32 accumulation -> loose tolerance vs f32 ref.
    assert jnp.allclose(logits, ref, atol=5e-2, rtol=5e-2), "Pallas logits mismatch vs reference"

    # In-kernel argmax must agree exactly with argmax of the kernel's own logits.
    assert preds.shape == (batch,)
    assert jnp.array_equal(preds.astype(jnp.int32),
                           jnp.argmax(logits, axis=1).astype(jnp.int32)), \
        "fused argmax mismatch vs kernel logits"

    # Forward-only path (matches MLP_STU.forward): no argmax, no preds output.
    logits_only = jax.block_until_ready(mlp_stu_forward(x, prepped, num_classes))
    assert logits_only.shape == (batch, num_classes)
    assert jnp.allclose(logits_only, ref, atol=5e-2, rtol=5e-2), \
        "forward-only logits mismatch vs reference"

    # Prediction-only path at a larger, non-tile-aligned batch: exercises the
    # multi-step grid (>=2 steps), batch padding, and the skipped-logits mode.
    batch2 = 300
    x2 = jax.random.normal(k_x2, (batch2, input_size), dtype=jnp.float32)
    preds2 = jax.block_until_ready(mlp_stu_prediction(x2, prepped, num_classes))
    assert preds2.shape == (batch2,)
    assert bool(jnp.all((preds2 >= 0) & (preds2 < num_classes)))
    ref2_preds = jnp.argmax(reference_forward(x2, params), axis=1)
    agree = float(jnp.mean((preds2 == ref2_preds).astype(jnp.float32)))
    assert agree >= 0.9, f"prediction agreement vs f32 reference too low: {agree}"

    print("KERNEL_OK")
</pallas_src>

<mosaic_0001>
module attributes {stable_mosaic.version = 11 : i64} {
  func.func @mlp_stu_kernel(%arg0: i32, %arg1: memref<8x32xbf16, #tpu.memory_space<vmem>>, %arg2: memref<32x128xbf16, #tpu.memory_space<vmem>>, %arg3: memref<1x128xf32, #tpu.memory_space<vmem>>, %arg4: memref<128x128xbf16, #tpu.memory_space<vmem>>, %arg5: memref<1x128xf32, #tpu.memory_space<vmem>>, %arg6: memref<128x128xbf16, #tpu.memory_space<vmem>>, %arg7: memref<1x128xf32, #tpu.memory_space<vmem>>, %arg8: memref<128x128xbf16, #tpu.memory_space<vmem>>, %arg9: memref<1x128xf32, #tpu.memory_space<vmem>>, %arg10: memref<8x128xf32, #tpu.memory_space<vmem>>, %arg11: memref<8x1xi32, #tpu.memory_space<vmem>>) attributes {dimension_semantics = [#tpu.dimension_semantics<parallel>], iteration_bounds = array<i64: 1>, scalar_prefetch = 0 : i64, scratch_operands = 0 : i64, tpu.core_type = #tpu.core_type<tc>, window_params = [{transform_indices = @transform_0, window_bounds = array<i64: 8, 32>}, {pipeline_mode = #tpu.pipeline_mode<synchronous>, transform_indices = @transform_1, window_bounds = array<i64: 32, 128>}, {pipeline_mode = #tpu.pipeline_mode<synchronous>, transform_indices = @transform_2, window_bounds = array<i64: 1, 128>}, {pipeline_mode = #tpu.pipeline_mode<synchronous>, transform_indices = @transform_3, window_bounds = array<i64: 128, 128>}, {pipeline_mode = #tpu.pipeline_mode<synchronous>, transform_indices = @transform_4, window_bounds = array<i64: 1, 128>}, {pipeline_mode = #tpu.pipeline_mode<synchronous>, transform_indices = @transform_5, window_bounds = array<i64: 128, 128>}, {pipeline_mode = #tpu.pipeline_mode<synchronous>, transform_indices = @transform_6, window_bounds = array<i64: 1, 128>}, {pipeline_mode = #tpu.pipeline_mode<synchronous>, transform_indices = @transform_7, window_bounds = array<i64: 128, 128>}, {pipeline_mode = #tpu.pipeline_mode<synchronous>, transform_indices = @transform_8, window_bounds = array<i64: 1, 128>}, {transform_indices = @transform_9, window_bounds = array<i64: 8, 128>}, {transform_indices = @transform_10, window_bounds = array<i64: 8, 1>}]} {
    %c0 = arith.constant 0 : index
    %c0_0 = arith.constant 0 : index
    %0 = vector.load %arg1[%c0, %c0_0] : memref<8x32xbf16, #tpu.memory_space<vmem>>, vector<8x32xbf16>
    %c0_1 = arith.constant 0 : index
    %c0_2 = arith.constant 0 : index
    %1 = vector.load %arg2[%c0_1, %c0_2] : memref<32x128xbf16, #tpu.memory_space<vmem>>, vector<32x128xbf16>
    %cst = arith.constant dense<0.000000e+00> : vector<8x128xf32>
    %2 = tpu.matmul %0, %1, %cst {dimension_numbers = #tpu.dot_dimension_numbers<[1], [0], [0], [1], [0, 0, 1, 1], [], []>} : vector<8x32xbf16>, vector<32x128xbf16>, vector<8x128xf32> -> vector<8x128xf32>
    %c0_3 = arith.constant 0 : index
    %c0_4 = arith.constant 0 : index
    %3 = vector.load %arg3[%c0_3, %c0_4] : memref<1x128xf32, #tpu.memory_space<vmem>>, vector<1x128xf32>
    %4 = vector.broadcast %3 : vector<1x128xf32> to vector<8x128xf32>
    %5 = arith.addf %2, %4 : vector<8x128xf32>
    %cst_5 = arith.constant 0.000000e+00 : f32
    %6 = vector.broadcast %cst_5 : f32 to vector<8x128xf32>
    %7 = arith.maximumf %5, %6 : vector<8x128xf32>
    %8 = arith.truncf %7 : vector<8x128xf32> to vector<8x128xbf16>
    %c0_6 = arith.constant 0 : index
    %c0_7 = arith.constant 0 : index
    %9 = vector.load %arg4[%c0_6, %c0_7] : memref<128x128xbf16, #tpu.memory_space<vmem>>, vector<128x128xbf16>
    %cst_8 = arith.constant dense<0.000000e+00> : vector<8x128xf32>
    %10 = tpu.matmul %8, %9, %cst_8 {dimension_numbers = #tpu.dot_dimension_numbers<[1], [0], [0], [1], [0, 0, 1, 1], [], []>} : vector<8x128xbf16>, vector<128x128xbf16>, vector<8x128xf32> -> vector<8x128xf32>
    %c0_9 = arith.constant 0 : index
    %c0_10 = arith.constant 0 : index
    %11 = vector.load %arg5[%c0_9, %c0_10] : memref<1x128xf32, #tpu.memory_space<vmem>>, vector<1x128xf32>
    %12 = vector.broadcast %11 : vector<1x128xf32> to vector<8x128xf32>
    %13 = arith.addf %10, %12 : vector<8x128xf32>
    %cst_11 = arith.constant 0.000000e+00 : f32
    %14 = vector.broadcast %cst_11 : f32 to vector<8x128xf32>
    %15 = arith.maximumf %13, %14 : vector<8x128xf32>
    %16 = arith.truncf %15 : vector<8x128xf32> to vector<8x128xbf16>
    %c0_12 = arith.constant 0 : index
    %c0_13 = arith.constant 0 : index
    %17 = vector.load %arg6[%c0_12, %c0_13] : memref<128x128xbf16, #tpu.memory_space<vmem>>, vector<128x128xbf16>
    %cst_14 = arith.constant dense<0.000000e+00> : vector<8x128xf32>
    %18 = tpu.matmul %16, %17, %cst_14 {dimension_numbers = #tpu.dot_dimension_numbers<[1], [0], [0], [1], [0, 0, 1, 1], [], []>} : vector<8x128xbf16>, vector<128x128xbf16>, vector<8x128xf32> -> vector<8x128xf32>
    %c0_15 = arith.constant 0 : index
    %c0_16 = arith.constant 0 : index
    %19 = vector.load %arg7[%c0_15, %c0_16] : memref<1x128xf32, #tpu.memory_space<vmem>>, vector<1x128xf32>
    %20 = vector.broadcast %19 : vector<1x128xf32> to vector<8x128xf32>
    %21 = arith.addf %18, %20 : vector<8x128xf32>
    %cst_17 = arith.constant 0.000000e+00 : f32
    %22 = vector.broadcast %cst_17 : f32 to vector<8x128xf32>
    %23 = arith.maximumf %21, %22 : vector<8x128xf32>
    %24 = arith.truncf %23 : vector<8x128xf32> to vector<8x128xbf16>
    %c0_18 = arith.constant 0 : index
    %c0_19 = arith.constant 0 : index
    %25 = vector.load %arg8[%c0_18, %c0_19] : memref<128x128xbf16, #tpu.memory_space<vmem>>, vector<128x128xbf16>
    %cst_20 = arith.constant dense<0.000000e+00> : vector<8x128xf32>
    %26 = tpu.matmul %24, %25, %cst_20 {dimension_numbers = #tpu.dot_dimension_numbers<[1], [0], [0], [1], [0, 0, 1, 1], [], []>} : vector<8x128xbf16>, vector<128x128xbf16>, vector<8x128xf32> -> vector<8x128xf32>
    %c0_21 = arith.constant 0 : index
    %c0_22 = arith.constant 0 : index
    %27 = vector.load %arg9[%c0_21, %c0_22] : memref<1x128xf32, #tpu.memory_space<vmem>>, vector<1x128xf32>
    %28 = vector.broadcast %27 : vector<1x128xf32> to vector<8x128xf32>
    %29 = arith.addf %26, %28 : vector<8x128xf32>
    %c0_23 = arith.constant 0 : index
    %c0_24 = arith.constant 0 : index
    %30 = vector.load %arg10[%c0_23, %c0_24] : memref<8x128xf32, #tpu.memory_space<vmem>>, vector<8x128xf32>
    tpu.vector_store %arg10[%c0_23, %c0_24], %29 {strides = array<i32>} : memref<8x128xf32, #tpu.memory_space<vmem>>, vector<8x128xf32>,
    %31 = tpu.iota {dimensions = array<i32: 1>} : vector<8x128xi32>
    %cst_25 = arith.constant dense<0xFF800000> : vector<8xf32>
    %32 = vector.multi_reduction <maximumf>, %29, %cst_25 [1] : vector<8x128xf32> to vector<8xf32>
    %33 = vector.shape_cast %32 : vector<8xf32> to vector<8x1xf32>
    %34 = vector.broadcast %33 : vector<8x1xf32> to vector<8x128xf32>
    %35 = arith.cmpf oeq, %29, %34 : vector<8x128xf32>
    %c128_i32 = arith.constant 128 : i32
    %36 = vector.broadcast %c128_i32 : i32 to vector<8x128xi32>
    %37 = arith.select %35, %31, %36 : vector<8x128xi1>, vector<8x128xi32>
    %cst_26 = arith.constant dense<2147483647> : vector<8xi32>
    %38 = vector.multi_reduction <minsi>, %37, %cst_26 [1] : vector<8x128xi32> to vector<8xi32>
    %39 = vector.shape_cast %38 : vector<8xi32> to vector<8x1xi32>
    %c0_27 = arith.constant 0 : index
    %c0_28 = arith.constant 0 : index
    %40 = vector.load %arg11[%c0_27, %c0_28] : memref<8x1xi32, #tpu.memory_space<vmem>>, vector<8x1xi32>
    tpu.vector_store %arg11[%c0_27, %c0_28], %39 {strides = array<i32>} : memref<8x1xi32, #tpu.memory_space<vmem>>, vector<8x1xi32>,
    return
  }
  func.func @transform_0(%arg0: i32) -> (i32, i32) {
    %c0_i32 = arith.constant 0 : i32
    %c0_i32_0 = arith.constant 0 : i32
    return %arg0, %c0_i32 : i32, i32
  }
  func.func @transform_1(%arg0: i32) -> (i32, i32) {
    %c0_i32 = arith.constant 0 : i32
    %c0_i32_0 = arith.constant 0 : i32
    %c0_i32_1 = arith.constant 0 : i32
    return %c0_i32, %c0_i32_0 : i32, i32
  }
  func.func @transform_2(%arg0: i32) -> (i32, i32) {
    %c0_i32 = arith.constant 0 : i32
    %c0_i32_0 = arith.constant 0 : i32
    %c0_i32_1 = arith.constant 0 : i32
    return %c0_i32, %c0_i32_0 : i32, i32
  }
  func.func @transform_3(%arg0: i32) -> (i32, i32) {
    %c0_i32 = arith.constant 0 : i32
    %c0_i32_0 = arith.constant 0 : i32
    %c0_i32_1 = arith.constant 0 : i32
    return %c0_i32, %c0_i32_0 : i32, i32
  }
  func.func @transform_4(%arg0: i32) -> (i32, i32) {
    %c0_i32 = arith.constant 0 : i32
    %c0_i32_0 = arith.constant 0 : i32
    %c0_i32_1 = arith.constant 0 : i32
    return %c0_i32, %c0_i32_0 : i32, i32
  }
  func.func @transform_5(%arg0: i32) -> (i32, i32) {
    %c0_i32 = arith.constant 0 : i32
    %c0_i32_0 = arith.constant 0 : i32
    %c0_i32_1 = arith.constant 0 : i32
    return %c0_i32, %c0_i32_0 : i32, i32
  }
  func.func @transform_6(%arg0: i32) -> (i32, i32) {
    %c0_i32 = arith.constant 0 : i32
    %c0_i32_0 = arith.constant 0 : i32
    %c0_i32_1 = arith.constant 0 : i32
    return %c0_i32, %c0_i32_0 : i32, i32
  }
  func.func @transform_7(%arg0: i32) -> (i32, i32) {
    %c0_i32 = arith.constant 0 : i32
    %c0_i32_0 = arith.constant 0 : i32
    %c0_i32_1 = arith.constant 0 : i32
    return %c0_i32, %c0_i32_0 : i32, i32
  }
  func.func @transform_8(%arg0: i32) -> (i32, i32) {
    %c0_i32 = arith.constant 0 : i32
    %c0_i32_0 = arith.constant 0 : i32
    %c0_i32_1 = arith.constant 0 : i32
    return %c0_i32, %c0_i32_0 : i32, i32
  }
  func.func @transform_9(%arg0: i32) -> (i32, i32) {
    %c0_i32 = arith.constant 0 : i32
    %c0_i32_0 = arith.constant 0 : i32
    return %arg0, %c0_i32 : i32, i32
  }
  func.func @transform_10(%arg0: i32) -> (i32, i32) {
    %c0_i32 = arith.constant 0 : i32
    %c0_i32_0 = arith.constant 0 : i32
    return %arg0, %c0_i32 : i32, i32
  }
}

</mosaic_0001>

<llo_original>
// kernel: mlp_stu_apply.1
$region0: #{mlp_stu_apply.1}
  #allocation0 [shape = 'u32[]', space=smem, size = 0x4, offset = 0x4, fixed_abs, tag = 'smem constant byte address 0x4 - core index']
  #allocation1 [shape = 'u32[72,128]{1,0:T(1,128)}', space=vmem, size = 0x9000, scoped, tag = 'internal scratch']
  %s0 = inlined_call_operand.vmem [shape: bf16[8,32], index: 0, kind: input, shape index: {}]
  %s1 = inlined_call_operand.hbm [shape: bf16[32,128], index: 1, kind: input, shape index: {}]
  %s2 = inlined_call_operand.vmem [shape: f32[1,128], index: 2, kind: input, shape index: {}]
  %s3 = inlined_call_operand.hbm [shape: bf16[128,128], index: 3, kind: input, shape index: {}]
  %s4 = inlined_call_operand.vmem [shape: f32[1,128], index: 4, kind: input, shape index: {}]
  %s5 = inlined_call_operand.hbm [shape: bf16[128,128], index: 5, kind: input, shape index: {}]
  %s6 = inlined_call_operand.vmem [shape: f32[1,128], index: 6, kind: input, shape index: {}]
  %s7 = inlined_call_operand.hbm [shape: bf16[128,128], index: 7, kind: input, shape index: {}]
  %s8 = inlined_call_operand.vmem [shape: f32[1,128], index: 8, kind: input, shape index: {}]
  %s9 = inlined_call_operand.hbm [shape: f32[8,128], index: 9, kind: output, shape index: {0}]
  %s10 = inlined_call_operand.vmem [shape: s32[8,1], index: 10, kind: output, shape index: {1}]
  %11 = xla_tuple %s9, %s10
  %s12 = sld [smem:[#allocation0]]
  $region70: #{mlp_stu_apply.1} parent=0
    _
  %s14 = ssub.s32 1, %s12
  %s15 = scalar_select 0, %s14, %s12
  $region1: #{mlp_stu_apply.1} parent=0
    #allocation2 [shape = 'u8[8192]{0}', space=vmem, size = 0x2000, scoped, tag = 'input window, operand 1, single buffered']
    #allocation3 [shape = 's32[1]{0}', space=sflag, size = 0x4, scoped, tag = 'scoped memory for mlp_stu_apply.1']
    #allocation4 [shape = 's32[1]{0}', space=sflag, size = 0x4, scoped, tag = 'scoped memory for mlp_stu_apply.1']
    #allocation5 [shape = 'u8[32768]{0}', space=vmem, size = 0x8000, scoped, tag = 'input window, operand 3, single buffered']
    #allocation6 [shape = 's32[1]{0}', space=sflag, size = 0x4, scoped, tag = 'scoped memory for mlp_stu_apply.1']
    #allocation7 [shape = 'u8[32768]{0}', space=vmem, size = 0x8000, scoped, tag = 'input window, operand 5, single buffered']
    #allocation8 [shape = 'u8[32768]{0}', space=vmem, size = 0x8000, scoped, tag = 'input window, operand 7, single buffered']
    #allocation9 [shape = 's32[1]{0}', space=sflag, size = 0x4, scoped, tag = 'scoped memory for mlp_stu_apply.1']
    #allocation10 [shape = 'u8[4096]{0}', space=vmem, size = 0x1000, scoped, tag = 'output window, operand 0, single buffered']
    %16 = vsyncpa [#allocation3], 0
    %17 = vsyncpa [#allocation6], 0
    %18 = vsyncpa [#allocation9], 0
    %19 = vsyncpa [#allocation4], 0
    // Predicated region
    $region2: #{mlp_stu_apply.1} parent=1 // pred_check
      _
    $region3: #{mlp_stu_apply.1} parent=1 // pred_check_branch
      %21 = sbr.rel (0) target = $region5
    $region4: #{mlp_stu_apply.1} parent=1 // pred_region
      _
    $region5: #{mlp_stu_apply.1} parent=1 // pred_fallthru
      _
    // Predicated region
    $region6: #{mlp_stu_apply.1} parent=1 // pred_check
      _
    $region7: #{mlp_stu_apply.1} parent=1 // pred_check_branch
      %23 = sbr.rel (0) target = $region9
    $region8: #{mlp_stu_apply.1} parent=1 // pred_region
      %25 = vsyncadd [#allocation3], 0
      %s26 = sshll.u32 %s1, 4
      %s27 = int_to_ptr.hbm [resolvable:$true] %s26
      %s28 = sshll.u32 [#allocation2], 4
      %s29 = int_to_ptr.vmem [resolvable:$true] %s28
      %34 = dma.hbm_to_vmem [thread:$0]  %s27, 256, %s29, [#allocation3], 64, 64, 4
    $region9: #{mlp_stu_apply.1} parent=1 // pred_fallthru
      _
    // Predicated region
    $region10: #{mlp_stu_apply.1} parent=1 // pred_check
      _
    $region11: #{mlp_stu_apply.1} parent=1 // pred_check_branch
      %36 = sbr.rel (0) target = $region13
    $region12: #{mlp_stu_apply.1} parent=1 // pred_region
      _
    $region13: #{mlp_stu_apply.1} parent=1 // pred_fallthru
      _
    // Predicated region
    $region14: #{mlp_stu_apply.1} parent=1 // pred_check
      _
    $region15: #{mlp_stu_apply.1} parent=1 // pred_check_branch
      %38 = sbr.rel (0) target = $region17
    $region16: #{mlp_stu_apply.1} parent=1 // pred_region
      %40 = vsyncadd [#allocation6], 0
      %s41 = sshll.u32 %s3, 4
      %s42 = int_to_ptr.hbm [resolvable:$true] %s41
      %s43 = sshll.u32 [#allocation5], 4
      %s44 = int_to_ptr.vmem [resolvable:$true] %s43
      %49 = dma.hbm_to_vmem [thread:$0]  %s42, 1024, %s44, [#allocation6], 64, 64, 4
    $region17: #{mlp_stu_apply.1} parent=1 // pred_fallthru
      _
    // Predicated region
    $region18: #{mlp_stu_apply.1} parent=1 // pred_check
      _
    $region19: #{mlp_stu_apply.1} parent=1 // pred_check_branch
      %51 = sbr.rel (0) target = $region21
    $region20: #{mlp_stu_apply.1} parent=1 // pred_region
      _
    $region21: #{mlp_stu_apply.1} parent=1 // pred_fallthru
      _
    // Predicated region
    $region22: #{mlp_stu_apply.1} parent=1 // pred_check
      _
    $region23: #{mlp_stu_apply.1} parent=1 // pred_check_branch
      %53 = sbr.rel (0) target = $region25
    $region24: #{mlp_stu_apply.1} parent=1 // pred_region
      %55 = vsyncadd [#allocation6], 0
      %s56 = sshll.u32 %s5, 4
      %s57 = int_to_ptr.hbm [resolvable:$true] %s56
      %s58 = sshll.u32 [#allocation7], 4
      %s59 = int_to_ptr.vmem [resolvable:$true] %s58
      %64 = dma.hbm_to_vmem [thread:$0]  %s57, 1024, %s59, [#allocation6], 64, 64, 4
    $region25: #{mlp_stu_apply.1} parent=1 // pred_fallthru
      _
    // Predicated region
    $region26: #{mlp_stu_apply.1} parent=1 // pred_check
      _
    $region27: #{mlp_stu_apply.1} parent=1 // pred_check_branch
      %66 = sbr.rel (0) target = $region29
    $region28: #{mlp_stu_apply.1} parent=1 // pred_region
      _
    $region29: #{mlp_stu_apply.1} parent=1 // pred_fallthru
      _
    // Predicated region
    $region30: #{mlp_stu_apply.1} parent=1 // pred_check
      _
    $region31: #{mlp_stu_apply.1} parent=1 // pred_check_branch
      %68 = sbr.rel (0) target = $region33
    $region32: #{mlp_stu_apply.1} parent=1 // pred_region
      %70 = vsyncadd [#allocation9], 0
      %s71 = sshll.u32 %s7, 4
      %s72 = int_to_ptr.hbm [resolvable:$true] %s71
      %s73 = sshll.u32 [#allocation8], 4
      %s74 = int_to_ptr.vmem [resolvable:$true] %s73
      %79 = dma.hbm_to_vmem [thread:$0]  %s72, 1024, %s74, [#allocation9], 64, 64, 4
    $region33: #{mlp_stu_apply.1} parent=1 // pred_fallthru
      _
    // Predicated region
    $region34: #{mlp_stu_apply.1} parent=1 // pred_check
      _
    $region35: #{mlp_stu_apply.1} parent=1 // pred_check_branch
      %81 = sbr.rel (0) target = $region37
    $region36: #{mlp_stu_apply.1} parent=1 // pred_region
      _
    $region37: #{mlp_stu_apply.1} parent=1 // pred_fallthru
      _
    // Predicated region
    $region38: #{mlp_stu_apply.1} parent=1 // pred_check
      _
    $region39: #{mlp_stu_apply.1} parent=1 // pred_check_branch
      %83 = sbr.rel (0) target = $region41
    $region40: #{mlp_stu_apply.1} parent=1 // pred_region
      %85 = dma.done [#allocation3], 256
    $region41: #{mlp_stu_apply.1} parent=1 // pred_fallthru
      _
    // Predicated region
    $region42: #{mlp_stu_apply.1} parent=1 // pred_check
      _
    $region43: #{mlp_stu_apply.1} parent=1 // pred_check_branch
      %87 = sbr.rel (0) target = $region45
    $region44: #{mlp_stu_apply.1} parent=1 // pred_region
      %89 = dma.done [#allocation6], 1024
    $region45: #{mlp_stu_apply.1} parent=1 // pred_fallthru
      _
    // Predicated region
    $region46: #{mlp_stu_apply.1} parent=1 // pred_check
      _
    $region47: #{mlp_stu_apply.1} parent=1 // pred_check_branch
      %91 = sbr.rel (0) target = $region49
    $region48: #{mlp_stu_apply.1} parent=1 // pred_region
      %93 = dma.done [#allocation6], 1024
    $region49: #{mlp_stu_apply.1} parent=1 // pred_fallthru
      _
    // Predicated region
    $region50: #{mlp_stu_apply.1} parent=1 // pred_check
      _
    $region51: #{mlp_stu_apply.1} parent=1 // pred_check_branch
      %95 = sbr.rel (0) target = $region53
    $region52: #{mlp_stu_apply.1} parent=1 // pred_region
      %97 = dma.done [#allocation9], 1024
    $region53: #{mlp_stu_apply.1} parent=1 // pred_fallthru
      _
    %v99 = vld [vmem:[%s0] sm:$0xf]
    %v100 = vld [vmem:[#allocation2] sm:$0xf]
    %v101 = vld [vmem:[#allocation2 + $0x4] sm:$0xf]
    %v102 = vld [vmem:[#allocation2 + $0x8] sm:$0xf]
    %v103 = vld [vmem:[#allocation2 + $0xc] sm:$0xf]
    %v104 = vld [vmem:[%s2] sm:$0x1]
    %v106 = vperm.slane %v104, 0
    %v112 = vunpack.c.l.b16 %v100
    %v113 = vunpack.c.l.b16 %v101
    %v114 = vunpack.c.l.b16 %v102
    %v115 = vunpack.c.l.b16 %v103
    %v116 = vpack.c.b16 %v113, %v112
    %v117 = vpack.c.b16 %v115, %v114
    %vm120 = vcmask 261120
    %v122 = vsel %vm120, %v99, 0
    %124 = vmatpush.bf16.msra.mxu0 0
    %125 = vmatpush.bf16.msra.mxu0 0
    %126 = vmatpush.bf16.msra.mxu0 0
    %127 = vmatpush.bf16.msra.mxu0 0
    %128 = vmatpush.bf16.msra.mxu0 0
    %129 = vmatpush.bf16.msra.mxu0 0
    %130 = vmatpush.bf16.msra.mxu0 %v117
    %131 = vmatpush.bf16.msra.mxu0 %v116
    %132 = vmatmul.bf16.gmra.mxu0 %v122
    %v133 = vpop.f32.mrf.mxu0
    %v134 = vadd.f32 %v106, %v133
    %v135 = vpop.f32.mrf.mxu0
    %136 = vdwg.mxu0
    %v137 = vmax.f32 %v134, 0.0
    %v138 = vpack.c.bf16 %v137, %v137
    %v139 = vld [vmem:[#allocation5] sm:$0xf]
    %v140 = vld [vmem:[#allocation5 + $0x4] sm:$0xf]
    %v141 = vld [vmem:[#allocation5 + $0x8] sm:$0xf]
    %v142 = vld [vmem:[#allocation5 + $0xc] sm:$0xf]
    %v143 = vld [vmem:[#allocation5 + $0x10] sm:$0xf]
    %v144 = vld [vmem:[#allocation5 + $0x14] sm:$0xf]
    %v145 = vld [vmem:[#allocation5 + $0x18] sm:$0xf]
    %v146 = vld [vmem:[#allocation5 + $0x1c] sm:$0xf]
    %v147 = vld [vmem:[#allocation5 + $0x20] sm:$0xf]
    %v148 = vld [vmem:[#allocation5 + $0x24] sm:$0xf]
    %v149 = vld [vmem:[#allocation5 + $0x28] sm:$0xf]
    %v150 = vld [vmem:[#allocation5 + $0x2c] sm:$0xf]
    %v151 = vld [vmem:[#allocation5 + $0x30] sm:$0xf]
    %v152 = vld [vmem:[#allocation5 + $0x34] sm:$0xf]
    %v153 = vld [vmem:[#allocation5 + $0x38] sm:$0xf]
    %v154 = vld [vmem:[#allocation5 + $0x3c] sm:$0xf]
    %v155 = vld [vmem:[%s4] sm:$0x1]
    %v157 = vperm.slane %v155, 0
    %v175 = vunpack.c.l.b16 %v139
    %v176 = vunpack.c.l.b16 %v140
    %v177 = vunpack.c.l.b16 %v141
    %v178 = vunpack.c.l.b16 %v142
    %v179 = vunpack.c.l.b16 %v143
    %v180 = vunpack.c.l.b16 %v144
    %v181 = vunpack.c.l.b16 %v145
    %v182 = vunpack.c.l.b16 %v146
    %v183 = vunpack.c.l.b16 %v147
    %v184 = vunpack.c.l.b16 %v148
    %v185 = vunpack.c.l.b16 %v149
    %v186 = vunpack.c.l.b16 %v150
    %v187 = vunpack.c.l.b16 %v151
    %v188 = vunpack.c.l.b16 %v152
    %v189 = vunpack.c.l.b16 %v153
    %v190 = vunpack.c.l.b16 %v154
    %v191 = vpack.c.b16 %v176, %v175
    %v192 = vpack.c.b16 %v178, %v177
    %v193 = vpack.c.b16 %v180, %v179
    %v194 = vpack.c.b16 %v182, %v181
    %v195 = vpack.c.b16 %v184, %v183
    %v196 = vpack.c.b16 %v186, %v185
    %v197 = vpack.c.b16 %v188, %v187
    %v198 = vpack.c.b16 %v190, %v189
    %207 = vmatpush.bf16.msra.mxu0 %v198
    %208 = vmatpush.bf16.msra.mxu0 %v197
    %209 = vmatpush.bf16.msra.mxu0 %v196
    %210 = vmatpush.bf16.msra.mxu0 %v195
    %211 = vmatpush.bf16.msra.mxu0 %v194
    %212 = vmatpush.bf16.msra.mxu0 %v193
    %213 = vmatpush.bf16.msra.mxu0 %v192
    %214 = vmatpush.bf16.msra.mxu0 %v191
    %215 = vmatmul.bf16.gmra.mxu0 %v138
    %v216 = vpop.f32.mrf.mxu0
    %v217 = vadd.f32 %v157, %v216
    %v218 = vpop.f32.mrf.mxu0
    %219 = vdwg.mxu0
    %v220 = vmax.f32 %v217, 0.0
    %v221 = vpack.c.bf16 %v220, %v220
    %v222 = vld [vmem:[#allocation7] sm:$0xf]
    %v223 = vld [vmem:[#allocation7 + $0x4] sm:$0xf]
    %v224 = vld [vmem:[#allocation7 + $0x8] sm:$0xf]
    %v225 = vld [vmem:[#allocation7 + $0xc] sm:$0xf]
    %v226 = vld [vmem:[#allocation7 + $0x10] sm:$0xf]
    %v227 = vld [vmem:[#allocation7 + $0x14] sm:$0xf]
    %v228 = vld [vmem:[#allocation7 + $0x18] sm:$0xf]
    %v229 = vld [vmem:[#allocation7 + $0x1c] sm:$0xf]
    %v230 = vld [vmem:[#allocation7 + $0x20] sm:$0xf]
    %v231 = vld [vmem:[#allocation7 + $0x24] sm:$0xf]
    %v232 = vld [vmem:[#allocation7 + $0x28] sm:$0xf]
    %v233 = vld [vmem:[#allocation7 + $0x2c] sm:$0xf]
    %v234 = vld [vmem:[#allocation7 + $0x30] sm:$0xf]
    %v235 = vld [vmem:[#allocation7 + $0x34] sm:$0xf]
    %v236 = vld [vmem:[#allocation7 + $0x38] sm:$0xf]
    %v237 = vld [vmem:[#allocation7 + $0x3c] sm:$0xf]
    %v238 = vld [vmem:[%s6] sm:$0x1]
    %v240 = vperm.slane %v238, 0
    %v258 = vunpack.c.l.b16 %v222
    %v259 = vunpack.c.l.b16 %v223
    %v260 = vunpack.c.l.b16 %v224
    %v261 = vunpack.c.l.b16 %v225
    %v262 = vunpack.c.l.b16 %v226
    %v263 = vunpack.c.l.b16 %v227
    %v264 = vunpack.c.l.b16 %v228
    %v265 = vunpack.c.l.b16 %v229
    %v266 = vunpack.c.l.b16 %v230
    %v267 = vunpack.c.l.b16 %v231
    %v268 = vunpack.c.l.b16 %v232
    %v269 = vunpack.c.l.b16 %v233
    %v270 = vunpack.c.l.b16 %v234
    %v271 = vunpack.c.l.b16 %v235
    %v272 = vunpack.c.l.b16 %v236
    %v273 = vunpack.c.l.b16 %v237
    %v274 = vpack.c.b16 %v259, %v258
    %v275 = vpack.c.b16 %v261, %v260
    %v276 = vpack.c.b16 %v263, %v262
    %v277 = vpack.c.b16 %v265, %v264
    %v278 = vpack.c.b16 %v267, %v266
    %v279 = vpack.c.b16 %v269, %v268
    %v280 = vpack.c.b16 %v271, %v270
    %v281 = vpack.c.b16 %v273, %v272
    %290 = vmatpush.bf16.msra.mxu0 %v281
    %291 = vmatpush.bf16.msra.mxu0 %v280
    %292 = vmatpush.bf16.msra.mxu0 %v279
    %293 = vmatpush.bf16.msra.mxu0 %v278
    %294 = vmatpush.bf16.msra.mxu0 %v277
    %295 = vmatpush.bf16.msra.mxu0 %v276
    %296 = vmatpush.bf16.msra.mxu0 %v275
    %297 = vmatpush.bf16.msra.mxu0 %v274
    %298 = vmatmul.bf16.gmra.mxu0 %v221
    %v299 = vpop.f32.mrf.mxu0
    %v300 = vadd.f32 %v240, %v299
    %v301 = vpop.f32.mrf.mxu0
    %302 = vdwg.mxu0
    %v303 = vmax.f32 %v300, 0.0
    %v304 = vpack.c.bf16 %v303, %v303
    %v305 = vld [vmem:[#allocation8] sm:$0xf]
    %v306 = vld [vmem:[#allocation8 + $0x4] sm:$0xf]
    %v307 = vld [vmem:[#allocation8 + $0x8] sm:$0xf]
    %v308 = vld [vmem:[#allocation8 + $0xc] sm:$0xf]
    %v309 = vld [vmem:[#allocation8 + $0x10] sm:$0xf]
    %v310 = vld [vmem:[#allocation8 + $0x14] sm:$0xf]
    %v311 = vld [vmem:[#allocation8 + $0x18] sm:$0xf]
    %v312 = vld [vmem:[#allocation8 + $0x1c] sm:$0xf]
    %v313 = vld [vmem:[#allocation8 + $0x20] sm:$0xf]
    %v314 = vld [vmem:[#allocation8 + $0x24] sm:$0xf]
    %v315 = vld [vmem:[#allocation8 + $0x28] sm:$0xf]
    %v316 = vld [vmem:[#allocation8 + $0x2c] sm:$0xf]
    %v317 = vld [vmem:[#allocation8 + $0x30] sm:$0xf]
    %v318 = vld [vmem:[#allocation8 + $0x34] sm:$0xf]
    %v319 = vld [vmem:[#allocation8 + $0x38] sm:$0xf]
    %v320 = vld [vmem:[#allocation8 + $0x3c] sm:$0xf]
    %v321 = vld [vmem:[%s8] sm:$0x1]
    %v323 = vperm.slane %v321, 0
    %v341 = vunpack.c.l.b16 %v305
    %v342 = vunpack.c.l.b16 %v306
    %v343 = vunpack.c.l.b16 %v307
    %v344 = vunpack.c.l.b16 %v308
    %v345 = vunpack.c.l.b16 %v309
    %v346 = vunpack.c.l.b16 %v310
    %v347 = vunpack.c.l.b16 %v311
    %v348 = vunpack.c.l.b16 %v312
    %v349 = vunpack.c.l.b16 %v313
    %v350 = vunpack.c.l.b16 %v314
    %v351 = vunpack.c.l.b16 %v315
    %v352 = vunpack.c.l.b16 %v316
    %v353 = vunpack.c.l.b16 %v317
    %v354 = vunpack.c.l.b16 %v318
    %v355 = vunpack.c.l.b16 %v319
    %v356 = vunpack.c.l.b16 %v320
    %v357 = vpack.c.b16 %v342, %v341
    %v358 = vpack.c.b16 %v344, %v343
    %v359 = vpack.c.b16 %v346, %v345
    %v360 = vpack.c.b16 %v348, %v347
    %v361 = vpack.c.b16 %v350, %v349
    %v362 = vpack.c.b16 %v352, %v351
    %v363 = vpack.c.b16 %v354, %v353
    %v364 = vpack.c.b16 %v356, %v355
    %373 = vmatpush.bf16.msra.mxu0 %v364
    %374 = vmatpush.bf16.msra.mxu0 %v363
    %375 = vmatpush.bf16.msra.mxu0 %v362
    %376 = vmatpush.bf16.msra.mxu0 %v361
    %377 = vmatpush.bf16.msra.mxu0 %v360
    %378 = vmatpush.bf16.msra.mxu0 %v359
    %379 = vmatpush.bf16.msra.mxu0 %v358
    %380 = vmatpush.bf16.msra.mxu0 %v357
    %381 = vmatmul.bf16.gmra.mxu0 %v304
    %v382 = vpop.f32.mrf.mxu0
    %v383 = vadd.f32 %v323, %v382
    %v384 = vpop.f32.mrf.mxu0
    %385 = vdwg.mxu0
    %386 = vst [vmem:[#allocation10] sm:$0xff] %v383
    %v387 = vlaneseq
    %v388 = vand.u32 %v387, 127
    %389 = vmax.xlane.f32.xlu0 %v383
    %v390 = vpop.xlane.xlu0 %389
    %vm391 = vcmp.eq.f32.partialorder %v383, %v390
    %v392 = vsel %vm391, %v388, 128
    %v393 = vand.u32 %v392, 65535
    %v394 = vshra.s32 %v392, 16
    %v395 = vcvt.s32.f32 %v393
    %v396 = vcvt.s32.f32 %v394
    %397 = vmin.xlane.f32.xlu0 %v396
    %v398 = vpop.xlane.xlu0 %397
    %vm399 = vcmp.eq.f32.partialorder %v396, %v398
    %v400 = vsel %vm399, %v395, inf
    %401 = vmin.xlane.f32.xlu0 %v400
    %v402 = vpop.xlane.xlu0 %401
    %v403 = vcvt.f32.s32 %v402
    %v404 = vcvt.f32.s32 %v398
    %v405 = vshll.u32 %v404, 16
    %v406 = vadd.s32 %v405, %v403
    %vm407 = vcmask 7168
    %408 = vst.msk [vmem:[%s10] sm:$0xff] %vm407, %v406
    // Predicated region
    $region54: #{mlp_stu_apply.1} parent=1 // pred_check
      _
    $region55: #{mlp_stu_apply.1} parent=1 // pred_check_branch
      %410 = sbr.rel (0) target = $region57
    $region56: #{mlp_stu_apply.1} parent=1 // pred_region
      %412 = vsyncadd [#allocation4], 0
      %s414 = sshll.u32 [#allocation10], 4
      %s415 = int_to_ptr.vmem [resolvable:$true] %s414
      %s416 = sshll.u32 %s9, 4
      %s417 = int_to_ptr.hbm [resolvable:$true] %s416
      %419 = dma.vmem_to_hbm [thread:$0]  %s415, 128, %s417, [#allocation4]
    $region57: #{mlp_stu_apply.1} parent=1 // pred_fallthru
      _
    // Predicated region
    $region58: #{mlp_stu_apply.1} parent=1 // pred_check
      _
    $region59: #{mlp_stu_apply.1} parent=1 // pred_check_branch
      %421 = sbr.rel (0) target = $region61
    $region60: #{mlp_stu_apply.1} parent=1 // pred_region
      _
    $region61: #{mlp_stu_apply.1} parent=1 // pred_fallthru
      _
    // Predicated region
    $region62: #{mlp_stu_apply.1} parent=1 // pred_check
      _
    $region63: #{mlp_stu_apply.1} parent=1 // pred_check_branch
      %423 = sbr.rel (0) target = $region65
    $region64: #{mlp_stu_apply.1} parent=1 // pred_region
      %425 = dma.done [#allocation4], 128
    $region65: #{mlp_stu_apply.1} parent=1 // pred_fallthru
      _
    // Predicated region
    $region66: #{mlp_stu_apply.1} parent=1 // pred_check
      _
    $region67: #{mlp_stu_apply.1} parent=1 // pred_check_branch
      %427 = sbr.rel (0) target = $region69
    $region68: #{mlp_stu_apply.1} parent=1 // pred_region
      _
    $region69: #{mlp_stu_apply.1} parent=1 // pred_fallthru
      _
    %428 = vsyncpa [#allocation3], 1
    %429 = vsyncpa [#allocation6], 1
    %430 = vsyncpa [#allocation9], 1
    %431 = vsyncpa [#allocation4], 1

</llo_original>
